<compile_context>
chip_gen: v5e
topology: v5e:2x2
jax: 0.10.0
libtpu: 0.0.40
codegen_flags: <defaults>
</compile_context>

<pallas_src>
import functools

import jax
import jax.numpy as jnp
from jax.experimental import pallas as pl
from jax.experimental.pallas import tpu as pltpu


# ----------------------------------------------------------------------------
# Kernels
# ----------------------------------------------------------------------------

def _outconv_vpu_kernel(w_ref, b_ref, x_ref, o_ref):
    """Tiny-channel path (C_in<=8, C_out<=8): broadcast-FMA on the VPU.

    w_ref: VMEM (c_out, c_in) f32
    b_ref: VMEM (c_out, 1)    f32
    x_ref: VMEM (c_in, T)     pixels on lanes (activation dtype)
    o_ref: VMEM (c_out, T)
    """
    c_in = x_ref.shape[0]
    x = x_ref[...]                                    # (c_in, T)
    w = w_ref[...]                                    # (c_out, c_in) f32
    # Single (c_out, T) f32 accumulator; unrolled over the tiny c_in.
    acc = w[:, 0:1] * x[0:1, :]
    for ci in range(1, c_in):
        acc = acc + w[:, ci:ci + 1] * x[ci:ci + 1, :]
    o_ref[...] = (acc + b_ref[...]).astype(o_ref.dtype)


def _outconv_mxu_kernel(w_ref, b_ref, x_ref, o_ref, acc_ref):
    """Large-channel path: (tco, tk) @ (tk, T) on the MXU, K-tiled.

    w_ref: VMEM (tco, tk)  activation dtype (pre-cast in wrapper)
    b_ref: VMEM (tco, 1)   f32
    x_ref: VMEM (tk, T)    activation dtype
    o_ref: VMEM (tco, T)
    acc_ref: VMEM (tco, T) f32 scratch accumulator
    """
    k = pl.program_id(3)

    @pl.when(k == 0)
    def _():
        acc_ref[...] = jnp.zeros_like(acc_ref)

    acc_ref[...] += jnp.dot(w_ref[...], x_ref[...],
                            preferred_element_type=jnp.float32)

    @pl.when(k == pl.num_programs(3) - 1)
    def _():
        o_ref[...] = (acc_ref[...] + b_ref[...]).astype(o_ref.dtype)


# ----------------------------------------------------------------------------
# Sizing helpers
# ----------------------------------------------------------------------------

def _round_up(x, m):
    return ((x + m - 1) // m) * m


def _sublane_tile(dtype):
    """Sublane packing tile: 8 for 32-bit, 16 for 16-bit, 32 for 8-bit."""
    return max(8, 32 // jnp.dtype(dtype).itemsize)


def _vmem_capacity_bytes():
    try:
        return int(pltpu.get_tpu_info().vmem_capacity_bytes)
    except Exception:
        return 64 << 20          # conservative (v7x has 64 MiB per TC)


def _pick_pixel_tile(hw, per_pixel_bytes, fixed_bytes, budget_bytes,
                     min_pixel_steps):
    """Largest 128-multiple pixel tile that fits the budget after subtracting
    resident (weight/bias/accumulator) blocks; capped so there are at least
    `min_pixel_steps` pixel blocks when the image allows it."""
    hw_pad = _round_up(hw, 128)
    avail = max(budget_bytes - fixed_bytes, per_pixel_bytes * 128)
    t = (avail // per_pixel_bytes // 128) * 128
    t = max(128, min(t, hw_pad))
    if min_pixel_steps > 1 and hw > 128:
        t = min(t, _round_up(pl.cdiv(hw, min_pixel_steps), 128))
    return t


# ----------------------------------------------------------------------------
# Wrapper
# ----------------------------------------------------------------------------

def outconv_2d(x_nchw, weight, bias, *, vmem_budget_bytes=None):
    """1x1 conv forward, matching nn.Conv2d(in_ch, out_ch, kernel_size=1).

    x_nchw : (N, C_in, H, W)
    weight : (C_out, C_in, 1, 1)   (PyTorch conv weight layout)
    bias   : (C_out,)
    returns: (N, C_out, H, W)
    """
    N, C_in, H, W = x_nchw.shape
    C_out = weight.shape[0]
    HW = H * W
    out_dtype = x_nchw.dtype

    # --- generation-aware VMEM budget ------------------------------------
    cap = _vmem_capacity_bytes()
    vmem_limit = int(min(cap // 2, 64 << 20))     # 32 MiB on v7x, 64 MiB on v5e/v6e
    if vmem_budget_bytes is None:
        vmem_budget_bytes = (vmem_limit * 2) // 3  # headroom for Mosaic scratch

    # Free contiguous reshape: pixels on the lane (last) axis, channels on
    # sublanes.  No NCHW<->NHWC transposes.
    x3 = x_nchw.reshape(N, C_in, HW)
    w_f32 = weight.reshape(C_out, C_in).astype(jnp.float32)
    b_f32 = bias.reshape(C_out, 1).astype(jnp.float32)

    x_item = jnp.dtype(x_nchw.dtype).itemsize
    o_item = jnp.dtype(out_dtype).itemsize
    min_pixel_steps = 2 if N == 1 else 1           # keep both v7x TCs busy

    cost = pl.CostEstimate(
        flops=2 * N * HW * C_in * C_out,
        transcendentals=0,
        bytes_accessed=N * HW * (C_in * x_item + C_out * o_item)
        + 4 * (C_in * C_out + C_out),
    )

    tiny_channels = (C_in <= 8) and (C_out <= 8)

    if tiny_channels:
        # ---------------- VPU broadcast-FMA path --------------------------
        c_in_pad = _round_up(C_in, _sublane_tile(x_nchw.dtype))
        c_out_pad = _round_up(C_out, _sublane_tile(out_dtype))
        # 2x double-buffered x/out blocks + f32 intermediates (cast + acc).
        per_pixel = (2 * (c_in_pad * x_item + c_out_pad * o_item)
                     + 4 * (c_in_pad + c_out_pad))
        # Resident (double-buffered) f32 weight + bias blocks, lane-padded.
        fixed = 2 * 4 * (_round_up(C_out, 8) * _round_up(C_in, 128)
                         + _round_up(C_out, 8) * 128)
        t_hw = _pick_pixel_tile(HW, per_pixel, fixed, vmem_budget_bytes,
                                min_pixel_steps)
        grid = (N, pl.cdiv(HW, t_hw))

        kernel = _outconv_vpu_kernel
        in_specs = [
            pl.BlockSpec((C_out, C_in), lambda n, p: (0, 0)),
            pl.BlockSpec((C_out, 1), lambda n, p: (0, 0)),
            pl.BlockSpec((None, C_in, t_hw), lambda n, p: (n, 0, p)),
        ]
        out_spec = pl.BlockSpec((None, C_out, t_hw), lambda n, p: (n, 0, p))
        scratch_shapes = []
        dims = ("parallel", "parallel")
        args = (w_f32, b_f32, x3)
    else:
        # ---------------- MXU path with channel tiling ---------------------
        # Cast weights to the activation dtype ONCE here (no per-step cast).
        w_act = w_f32.astype(x_nchw.dtype)

        def _pick_ch_tile(c, targets=(256, 128)):
            for t in targets:
                if c % t == 0:
                    return t
            return c
        # TODO(synk): use 128-wide tiles on v5e (4x128^2 MXU) and support
        # ragged channel tails; 256 is right for v6e/v7x.
        tk = _pick_ch_tile(C_in)
        tco = _pick_ch_tile(C_out)

        tk_pad = _round_up(tk, _sublane_tile(x_nchw.dtype))
        tco_pad = _round_up(tco, _sublane_tile(out_dtype))
        # 2x double-buffered x/out blocks + single f32 accumulator block.
        per_pixel = 2 * (tk_pad * x_item + tco_pad * o_item) + 4 * tco_pad
        # Resident weight (activation dtype) + bias (f32) blocks, x2 buffers.
        fixed = 2 * (_round_up(tco, _sublane_tile(x_nchw.dtype))
                     * _round_up(tk, 128) * x_item
                     + _round_up(tco, 8) * 128 * 4)
        t_hw = _pick_pixel_tile(HW, per_pixel, fixed, vmem_budget_bytes,
                                min_pixel_steps)
        grid = (N, pl.cdiv(HW, t_hw), C_out // tco, C_in // tk)

        kernel = _outconv_mxu_kernel
        in_specs = [
            pl.BlockSpec((tco, tk), lambda n, p, co, k: (co, k)),
            pl.BlockSpec((tco, 1), lambda n, p, co, k: (co, 0)),
            pl.BlockSpec((None, tk, t_hw), lambda n, p, co, k: (n, k, p)),
        ]
        out_spec = pl.BlockSpec((None, tco, t_hw), lambda n, p, co, k: (n, co, p))
        scratch_shapes = [pltpu.VMEM((tco, t_hw), jnp.float32)]
        dims = ("parallel", "parallel", "parallel", "arbitrary")
        args = (w_act, b_f32, x3)

    # TODO(synk): sweep pipeline_mode=pl.Buffered(3) on the x BlockSpec once
    # per-step tiles are moderate (pure HBM-streaming kernel), within budget.
    out3 = pl.pallas_call(
        kernel,
        out_shape=jax.ShapeDtypeStruct((N, C_out, HW), out_dtype),
        grid_spec=pltpu.PrefetchScalarGridSpec(
            num_scalar_prefetch=0,
            grid=grid,
            in_specs=in_specs,
            out_specs=out_spec,
            scratch_shapes=scratch_shapes,
        ),
        compiler_params=pltpu.CompilerParams(
            dimension_semantics=dims,
            vmem_limit_bytes=vmem_limit,
        ),
        cost_estimate=cost,
    )(*args)

    # Free contiguous reshape back to NCHW.
    return out3.reshape(N, C_out, H, W)


# ----------------------------------------------------------------------------
# Self-test
# ----------------------------------------------------------------------------

def _reference(x, weight, bias):
    C_out, C_in = weight.shape[0], weight.shape[1]
    return (jnp.einsum("nchw,oc->nohw", x, weight.reshape(C_out, C_in))
            + bias[None, :, None, None])


if __name__ == "__main__":
    key = jax.random.PRNGKey(0)

    # --- primary test: shapes consistent with the module (tiny channels) ---
    N, C_in, C_out, H, W = 2, 4, 3, 16, 16
    kx, kw, kb, key = jax.random.split(key, 4)
    x = jax.random.normal(kx, (N, C_in, H, W), dtype=jnp.float32)
    fan_in = C_in
    bound = 1.0 / (fan_in ** 0.5)
    weight = jax.random.uniform(kw, (C_out, C_in, 1, 1), jnp.float32, -bound, bound)
    bias = jax.random.uniform(kb, (C_out,), jnp.float32, -bound, bound)

    y = outconv_2d(x, weight, bias)
    jax.block_until_ready(y)
    assert y.shape == (N, C_out, H, W)
    assert jnp.allclose(y, _reference(x, weight, bias), atol=1e-5, rtol=1e-5)

    # --- secondary test: exercises the MXU / K-accumulator path -----------
    N2, C_in2, C_out2, H2, W2 = 2, 32, 16, 16, 16
    kx2, kw2, kb2, key = jax.random.split(key, 4)
    x2 = jax.random.normal(kx2, (N2, C_in2, H2, W2), dtype=jnp.float32)
    bound2 = 1.0 / (C_in2 ** 0.5)
    w2 = jax.random.uniform(kw2, (C_out2, C_in2, 1, 1), jnp.float32, -bound2, bound2)
    b2 = jax.random.uniform(kb2, (C_out2,), jnp.float32, -bound2, bound2)

    y2 = outconv_2d(x2, w2, b2)
    jax.block_until_ready(y2)
    assert y2.shape == (N2, C_out2, H2, W2)
    assert jnp.allclose(y2, _reference(x2, w2, b2), atol=1e-4, rtol=1e-4)

    print("KERNEL_OK")
</pallas_src>

<mosaic_0001>
module attributes {stable_mosaic.version = 11 : i64} {
  func.func @_outconv_vpu_kernel(%arg0: i32, %arg1: i32, %arg2: memref<3x4xf32, #tpu.memory_space<vmem>>, %arg3: memref<3x1xf32, #tpu.memory_space<vmem>>, %arg4: memref<1x4x256xf32, #tpu.memory_space<vmem>>, %arg5: memref<1x3x256xf32, #tpu.memory_space<vmem>>) attributes {dimension_semantics = [#tpu.dimension_semantics<parallel>, #tpu.dimension_semantics<parallel>], iteration_bounds = array<i64: 2, 1>, scalar_prefetch = 0 : i64, scratch_operands = 0 : i64, tpu.core_type = #tpu.core_type<tc>, window_params = [{pipeline_mode = #tpu.pipeline_mode<synchronous>, transform_indices = @transform_0, window_bounds = array<i64: 3, 4>}, {pipeline_mode = #tpu.pipeline_mode<synchronous>, transform_indices = @transform_1, window_bounds = array<i64: 3, 1>}, {transform_indices = @transform_2, window_bounds = array<i64: 1, 4, 256>}, {transform_indices = @transform_3, window_bounds = array<i64: 1, 3, 256>}]} {
    %c0 = arith.constant 0 : index
    %c0_0 = arith.constant 0 : index
    %c0_1 = arith.constant 0 : index
    %0 = vector.load %arg4[%c0, %c0_0, %c0_1] : memref<1x4x256xf32, #tpu.memory_space<vmem>>, vector<1x4x256xf32>
    %1 = vector.shape_cast %0 : vector<1x4x256xf32> to vector<4x256xf32>
    %c0_2 = arith.constant 0 : index
    %c0_3 = arith.constant 0 : index
    %2 = vector.load %arg2[%c0_2, %c0_3] : memref<3x4xf32, #tpu.memory_space<vmem>>, vector<3x4xf32>
    %3 = vector.extract_strided_slice %2 {offsets = [0, 0], sizes = [3, 1], strides = [1, 1]} : vector<3x4xf32> to vector<3x1xf32>
    %4 = vector.extract_strided_slice %1 {offsets = [0, 0], sizes = [1, 256], strides = [1, 1]} : vector<4x256xf32> to vector<1x256xf32>
    %5 = vector.broadcast %3 : vector<3x1xf32> to vector<3x256xf32>
    %6 = vector.broadcast %4 : vector<1x256xf32> to vector<3x256xf32>
    %7 = arith.mulf %5, %6 : vector<3x256xf32>
    %8 = vector.extract_strided_slice %2 {offsets = [0, 1], sizes = [3, 1], strides = [1, 1]} : vector<3x4xf32> to vector<3x1xf32>
    %9 = vector.extract_strided_slice %1 {offsets = [1, 0], sizes = [1, 256], strides = [1, 1]} : vector<4x256xf32> to vector<1x256xf32>
    %10 = vector.broadcast %8 : vector<3x1xf32> to vector<3x256xf32>
    %11 = vector.broadcast %9 : vector<1x256xf32> to vector<3x256xf32>
    %12 = arith.mulf %10, %11 : vector<3x256xf32>
    %13 = arith.addf %7, %12 : vector<3x256xf32>
    %14 = vector.extract_strided_slice %2 {offsets = [0, 2], sizes = [3, 1], strides = [1, 1]} : vector<3x4xf32> to vector<3x1xf32>
    %15 = vector.extract_strided_slice %1 {offsets = [2, 0], sizes = [1, 256], strides = [1, 1]} : vector<4x256xf32> to vector<1x256xf32>
    %16 = vector.broadcast %14 : vector<3x1xf32> to vector<3x256xf32>
    %17 = vector.broadcast %15 : vector<1x256xf32> to vector<3x256xf32>
    %18 = arith.mulf %16, %17 : vector<3x256xf32>
    %19 = arith.addf %13, %18 : vector<3x256xf32>
    %20 = vector.extract_strided_slice %2 {offsets = [0, 3], sizes = [3, 1], strides = [1, 1]} : vector<3x4xf32> to vector<3x1xf32>
    %21 = vector.extract_strided_slice %1 {offsets = [3, 0], sizes = [1, 256], strides = [1, 1]} : vector<4x256xf32> to vector<1x256xf32>
    %22 = vector.broadcast %20 : vector<3x1xf32> to vector<3x256xf32>
    %23 = vector.broadcast %21 : vector<1x256xf32> to vector<3x256xf32>
    %24 = arith.mulf %22, %23 : vector<3x256xf32>
    %25 = arith.addf %19, %24 : vector<3x256xf32>
    %c0_4 = arith.constant 0 : index
    %c0_5 = arith.constant 0 : index
    %26 = vector.load %arg3[%c0_4, %c0_5] : memref<3x1xf32, #tpu.memory_space<vmem>>, vector<3x1xf32>
    %27 = vector.broadcast %26 : vector<3x1xf32> to vector<3x256xf32>
    %28 = arith.addf %25, %27 : vector<3x256xf32>
    %c0_6 = arith.constant 0 : index
    %c0_7 = arith.constant 0 : index
    %c0_8 = arith.constant 0 : index
    %29 = vector.load %arg5[%c0_6, %c0_7, %c0_8] : memref<1x3x256xf32, #tpu.memory_space<vmem>>, vector<1x3x256xf32>
    %30 = vector.shape_cast %29 : vector<1x3x256xf32> to vector<3x256xf32>
    %31 = vector.shape_cast %28 : vector<3x256xf32> to vector<1x3x256xf32>
    tpu.vector_store %arg5[%c0_6, %c0_7, %c0_8], %31 {strides = array<i32>} : memref<1x3x256xf32, #tpu.memory_space<vmem>>, vector<1x3x256xf32>,
    return
  }
  func.func @transform_0(%arg0: i32, %arg1: i32) -> (i32, i32) {
    %c0_i32 = arith.constant 0 : i32
    %c0_i32_0 = arith.constant 0 : i32
    %c0_i32_1 = arith.constant 0 : i32
    return %c0_i32, %c0_i32_0 : i32, i32
  }
  func.func @transform_1(%arg0: i32, %arg1: i32) -> (i32, i32) {
    %c0_i32 = arith.constant 0 : i32
    %c0_i32_0 = arith.constant 0 : i32
    %c0_i32_1 = arith.constant 0 : i32
    return %c0_i32, %c0_i32_0 : i32, i32
  }
  func.func @transform_2(%arg0: i32, %arg1: i32) -> (i32, i32, i32) {
    %c0_i32 = arith.constant 0 : i32
    %c0_i32_0 = arith.constant 0 : i32
    return %arg0, %c0_i32, %arg1 : i32, i32, i32
  }
  func.func @transform_3(%arg0: i32, %arg1: i32) -> (i32, i32, i32) {
    %c0_i32 = arith.constant 0 : i32
    %c0_i32_0 = arith.constant 0 : i32
    return %arg0, %c0_i32, %arg1 : i32, i32, i32
  }
}

</mosaic_0001>

<llo_original>
// kernel: tpu_custom_call.1
$region0: #{tpu_custom_call.1}
  #allocation0 [shape = 'u32[]', space=smem, size = 0x4, offset = 0x4, fixed_abs, tag = 'smem constant byte address 0x4 - core index']
  #allocation1 [shape = 'u32[72,128]{1,0:T(1,128)}', space=vmem, size = 0x9000, scoped, tag = 'internal scratch']
  %s0 = inlined_call_operand.vmem [shape: f32[3,4], index: 0, kind: input, shape index: {}]
  %s1 = inlined_call_operand.vmem [shape: f32[3,1], index: 1, kind: input, shape index: {}]
  %s2 = inlined_call_operand.hbm [shape: f32[2,4,256], index: 2, kind: input, shape index: {}]
  %s3 = inlined_call_operand.vmem [shape: f32[2,3,256], index: 3, kind: output, shape index: {}]
  %s4 = sld [smem:[#allocation0]]
  $region49: #{tpu_custom_call.1} parent=0
    _
  %s6 = ssub.s32 1, %s4
  %s7 = scalar_select 0, %s6, %s4
  $region1: #{tpu_custom_call.1} parent=0
    #allocation2 [shape = 'u8[8192]{0}', space=vmem, size = 0x2000, scoped, tag = 'input window, operand 2']
    #allocation3 [shape = 's32[2]{0}', space=sflag, size = 0x8, scoped, tag = 'scoped memory for tpu_custom_call.1']
    %8 = vsyncpa [#allocation3], 0
    %s9 = scalar_lea.sflag [#allocation3], 1
    %10 = vsyncpa %s9, 0
    loop: start=0, step=1, limit=4
    $region2: #{tpu_custom_call.1} parent=1 // loop_pre_header
      _
    $region3: #{tpu_custom_call.1} parent=1 // loop_header
      %s12 = sphi 0, %s16
      %p13 = scmp.ge.s32.totalorder %s12, 4
      %s19 = sphi 0, %s31
      %s20 = sphi 0, %s27
      %s21 = sphi 0, %s19
      %s22 = sphi 0, %s20
      %s23 = sphi 0, %s21
      %s24 = sphi 0, %s22
      %s32 = sphi 0, %s32
      %s34 = sphi 0, %s32
      %s35 = sphi 0, %s34
      %s49 = sphi 0, %s35
      %s53 = sphi 0, %s53
      %s55 = sphi 0, %s53
      %s56 = sphi 0, %s55
      %s70 = sphi 0, %s56
      %s78 = sphi 0, %s80
      %s81 = sphi 0, %s78
      %s82 = sphi 0, %s81
      %s98 = sphi 0, %s82
      %s106 = sphi 0, %s108
      %s109 = sphi 0, %s106
      %s110 = sphi 0, %s109
      %s126 = sphi 0, %s110
    $region4: #{tpu_custom_call.1} parent=1 // loop_header_branch
      %15 = sbr.rel (%p13) target = $region8
    $region5: #{tpu_custom_call.1} parent=1 // loop_body
      %s17 = ssub.s32 %s12, 1
      %s18 = ssub.s32 %s12, 2
      %s25 = sadd.s32 1, %s20
      %p26 = scmp.ge.s32.totalorder %s25, 1
      %s27 = scalar_select %p26, 0, %s25
      %s28 = sadd.s32 1, %s19
      %s29 = scalar_select %p26, %s28, %s19
      %p30 = scmp.ge.s32.totalorder %s29, 2
      %s31 = scalar_select %p30, 0, %s29
      %s33 = sadd.s32 %s32, 1
      %p36 = scmp.eq.s32.totalorder %s12, 1
      %p37 = scmp.ne.s32.totalorder %s32, %s34
      %p38 = scmp.eq.s32.totalorder %s12, 0
      %p39 = por %p37, %p38
      %p40 = scmp.ne.s32.totalorder %s32, %s34
      %p41 = scmp.eq.s32.totalorder %s17, 1
      %p42 = por %p40, %p41
      %p43 = scmp.ne.s32.totalorder %s34, %s35
      %p44 = scmp.eq.s32.totalorder %s17, 0
      %p45 = por %p43, %p44
      %p46 = scmp.ne.s32.totalorder %s34, %s35
      %p47 = scmp.eq.s32.totalorder %s18, 1
      %p48 = por %p46, %p47
      %p50 = scmp.ne.s32.totalorder %s35, %s49
      %p51 = scmp.eq.s32.totalorder %s18, 0
      %p52 = por %p50, %p51
      %s54 = sadd.s32 %s53, 1
      %p57 = scmp.eq.s32.totalorder %s12, 1
      %p58 = scmp.ne.s32.totalorder %s53, %s55
      %p59 = scmp.eq.s32.totalorder %s12, 0
      %p60 = por %p58, %p59
      %p61 = scmp.ne.s32.totalorder %s53, %s55
      %p62 = scmp.eq.s32.totalorder %s17, 1
      %p63 = por %p61, %p62
      %p64 = scmp.ne.s32.totalorder %s55, %s56
      %p65 = scmp.eq.s32.totalorder %s17, 0
      %p66 = por %p64, %p65
      %p67 = scmp.ne.s32.totalorder %s55, %s56
      %p68 = scmp.eq.s32.totalorder %s18, 1
      %p69 = por %p67, %p68
      %p71 = scmp.ne.s32.totalorder %s56, %s70
      %p72 = scmp.eq.s32.totalorder %s18, 0
      %p73 = por %p71, %p72
      %s74 = ssub.s32 %s19, %s31
      %s75 = ssub.s32 %s20, %s27
      %s76 = sor.u32 %s74, %s75
      %p77 = scmp.eq.s32.totalorder %s76, 0
      %s79 = sadd.s32 %s78, 1
      %s80 = scalar_select %p77, %s78, %s79
      %p83 = pneg %p77
      %p84 = scmp.eq.s32.totalorder %s12, 1
      %p85 = por %p83, %p84
      %p86 = scmp.ne.s32.totalorder %s78, %s81
      %p87 = scmp.eq.s32.totalorder %s12, 0
      %p88 = por %p86, %p87
      %p89 = scmp.ne.s32.totalorder %s78, %s81
      %p90 = scmp.eq.s32.totalorder %s17, 1
      %p91 = por %p89, %p90
      %p92 = scmp.ne.s32.totalorder %s81, %s82
      %p93 = scmp.eq.s32.totalorder %s17, 0
      %p94 = por %p92, %p93
      %p95 = scmp.ne.s32.totalorder %s81, %s82
      %p96 = scmp.eq.s32.totalorder %s18, 1
      %p97 = por %p95, %p96
      %p99 = scmp.ne.s32.totalorder %s82, %s98
      %p100 = scmp.eq.s32.totalorder %s18, 0
      %p101 = por %p99, %p100
      %s102 = ssub.s32 %s19, %s31
      %s103 = ssub.s32 %s20, %s27
      %s104 = sor.u32 %s102, %s103
      %p105 = scmp.eq.s32.totalorder %s104, 0
      %s107 = sadd.s32 %s106, 1
      %s108 = scalar_select %p105, %s106, %s107
      %p111 = pneg %p105
      %p112 = scmp.eq.s32.totalorder %s12, 1
      %p113 = por %p111, %p112
      %p114 = scmp.ne.s32.totalorder %s106, %s109
      %p115 = scmp.eq.s32.totalorder %s12, 0
      %p116 = por %p114, %p115
      %p117 = scmp.ne.s32.totalorder %s106, %s109
      %p118 = scmp.eq.s32.totalorder %s17, 1
      %p119 = por %p117, %p118
      %p120 = scmp.ne.s32.totalorder %s109, %s110
      %p121 = scmp.eq.s32.totalorder %s17, 0
      %p122 = por %p120, %p121
      %p123 = scmp.ne.s32.totalorder %s109, %s110
      %p124 = scmp.eq.s32.totalorder %s18, 1
      %p125 = por %p123, %p124
      %p127 = scmp.ne.s32.totalorder %s110, %s126
      %p128 = scmp.eq.s32.totalorder %s18, 0
      %p129 = por %p127, %p128
      %p130 = scmp.le.s32.totalorder 1, %s12
      %p131 = scmp.lt.s32.totalorder %s12, 3
      %p132 = pnand %p130, %p131
      %p133 = pneg %p132
      // Predicated region
      $region9: #{tpu_custom_call.1} parent=5 // pred_check
        _
      $region10: #{tpu_custom_call.1} parent=5 // pred_check_branch
        %135 = sbr.rel (%p132) target = $region12
      $region11: #{tpu_custom_call.1} parent=5 // pred_region
        %s136 = ssub.s32 %s12, 1
        // Predicated region
        $region13: #{tpu_custom_call.1} parent=11 // pred_check
          %p137 = pneg %p45
        $region14: #{tpu_custom_call.1} parent=11 // pred_check_branch
          %139 = sbr.rel (%p137) target = $region16
        $region15: #{tpu_custom_call.1} parent=11 // pred_region
          _
        $region16: #{tpu_custom_call.1} parent=11 // pred_fallthru
          _
        // Predicated region
        $region17: #{tpu_custom_call.1} parent=11 // pred_check
          %p140 = pneg %p66
        $region18: #{tpu_custom_call.1} parent=11 // pred_check_branch
          %142 = sbr.rel (%p140) target = $region20
        $region19: #{tpu_custom_call.1} parent=11 // pred_region
          _
        $region20: #{tpu_custom_call.1} parent=11 // pred_fallthru
          _
      $region12: #{tpu_custom_call.1} parent=5 // pred_fallthru
        _
      %p143 = scmp.lt.s32.totalorder %s12, 2
      // Predicated region
      $region21: #{tpu_custom_call.1} parent=5 // pred_check
        %p144 = pneg %p143
      $region22: #{tpu_custom_call.1} parent=5 // pred_check_branch
        %146 = sbr.rel (%p144) target = $region24
      $region23: #{tpu_custom_call.1} parent=5 // pred_region
        // Predicated region
        $region25: #{tpu_custom_call.1} parent=23 // pred_check
          %p147 = pneg %p88
        $region26: #{tpu_custom_call.1} parent=23 // pred_check_branch
          %149 = sbr.rel (%p147) target = $region28
        $region27: #{tpu_custom_call.1} parent=23 // pred_region
          %s150 = sand.u32 %s78, 1
          %s151 = scalar_lea.sflag [#allocation3], %s150
          %s152 = sand.u32 %s78, 1
          %s153 = smul.addr %s152, 8
          %s154 = scalar_lea.vmem [#allocation2], %s153
          %s155 = smul.u32 2, %s20
          %157 = vsyncadd %s151, 0
          %s158 = smul.addr %s19, 2
          %s159 = sadd.s32 %s155, %s158
          %s160 = smul.addr %s159, 4
          %s161 = scalar_lea.hbm %s2, %s160
          %s163 = sshll.u32 %s161, 4
          %s164 = int_to_ptr.hbm [resolvable:$true] %s163
          %s165 = sshll.u32 %s154, 4
          %s166 = int_to_ptr.vmem [resolvable:$true] %s165
          %168 = dma.hbm_to_vmem [thread:$0]  %s164, 128, %s166, %s151
        $region28: #{tpu_custom_call.1} parent=23 // pred_fallthru
          _
      $region24: #{tpu_custom_call.1} parent=5 // pred_fallthru
        _
      %p169 = scmp.le.s32.totalorder 1, %s12
      %p170 = scmp.lt.s32.totalorder %s12, 3
      %p171 = pnand %p169, %p170
      %p172 = pneg %p171
      // Predicated region
      $region29: #{tpu_custom_call.1} parent=5 // pred_check
        _
      $region30: #{tpu_custom_call.1} parent=5 // pred_check_branch
        %174 = sbr.rel (%p171) target = $region32
      $region31: #{tpu_custom_call.1} parent=5 // pred_region
        %s175 = ssub.s32 %s12, 1
        %s176 = sand.u32 %s81, 1
        %s177 = scalar_lea.sflag [#allocation3], %s176
        %s178 = sand.u32 %s81, 1
        %s179 = smul.addr %s178, 8
        %s180 = scalar_lea.vmem [#allocation2], %s179
        // Predicated region
        $region33: #{tpu_custom_call.1} parent=31 // pred_check
          %p181 = pneg %p94
        $region34: #{tpu_custom_call.1} parent=31 // pred_check_branch
          %183 = sbr.rel (%p181) target = $region36
        $region35: #{tpu_custom_call.1} parent=31 // pred_region
          %185 = dma.done %s177, 128
        $region36: #{tpu_custom_call.1} parent=31 // pred_fallthru
          _
        %p186 = pneg %p45
        %p187 = pneg %p42
        %p188 = pneg %p66
        %p189 = pneg %p63
        %s190 = sand.u32 %s81, 1
        %s191 = scalar_lea.sflag [#allocation3], %s190
        %s192 = sand.u32 %s81, 1
        %s193 = smul.addr %s192, 8
        %s194 = scalar_lea.vmem [#allocation2], %s193
        %p195 = pneg %p94
        %p196 = pneg %p91
        %p197 = pneg %p122
        %p198 = pneg %p119
        %s199 = smul.u32 2, %s22
        %p200 = scmp.lt.s32.totalorder %s21, 1
        %s201 = scalar_select %p200, %s21, 1
        %p202 = scmp.lt.s32.totalorder %s199, 1
        %s203 = scalar_select %p202, %s199, 1
        %s204 = smul.addr %s201, 2
        %s205 = sadd.s32 %s203, %s204
        %s206 = smul.addr %s205, 4
        %s207 = scalar_lea.vmem %s3, %s206
        %s208 = smul.u32 2, %s22
        %s209 = smul.u32 2, %s22
        %p210 = scmp.lt.s32.totalorder %s21, 1
        %s211 = scalar_select %p210, %s21, 1
        %p212 = scmp.lt.s32.totalorder %s209, 1
        %s213 = scalar_select %p212, %s209, 1
        %s214 = smul.addr %s211, 2
        %s215 = sadd.s32 %s213, %s214
        %s216 = smul.addr %s215, 4
        %s217 = scalar_lea.vmem %s3, %s216
        %s218 = smul.u32 2, %s22
        %v219 = vld [vmem:[%s180] sm:$0xff]
        %v220 = vld [vmem:[%s0] sm:$0x7]
        %222 = vset.pattern.permute.xlu0 0
        %223 = vperm.xlu0 %222, %v220
        %v224 = vpop.permute.xlu0 %223
        %v227 = vperm.slane %v219, 0
        %v228 = vperm.slane %v219, 4
        %v231 = vperm.slane %v227, 0
        %v232 = vperm.slane %v228, 0
        %v233 = vmul.f32 %v224, %v231
        %v234 = vmul.f32 %v224, %v232
        %235 = vset.pattern.permute.xlu0 1
        %236 = vperm.xlu0 %235, %v220
        %v237 = vpop.permute.xlu0 %236
        %v239 = vperm.slane %v219, 1
        %v240 = vperm.slane %v219, 5
        %v243 = vperm.slane %v239, 1
        %v244 = vperm.slane %v240, 1
        %v245 = vmul.f32 %v237, %v243
        %v246 = vmul.f32 %v237, %v244
        %v247 = vadd.f32 %v233, %v245
        %v248 = vadd.f32 %v234, %v246
        %249 = vset.pattern.permute.xlu0 2
        %250 = vperm.xlu0 %249, %v220
        %v251 = vpop.permute.xlu0 %250
        %v253 = vperm.slane %v219, 2
        %v254 = vperm.slane %v219, 6
        %v257 = vperm.slane %v253, 2
        %v258 = vperm.slane %v254, 2
        %v259 = vmul.f32 %v251, %v257
        %v260 = vmul.f32 %v251, %v258
        %v261 = vadd.f32 %v247, %v259
        %v262 = vadd.f32 %v248, %v260
        %263 = vset.pattern.permute.xlu0 3
        %264 = vperm.xlu0 %263, %v220
        %v265 = vpop.permute.xlu0 %264
        %v267 = vperm.slane %v219, 3
        %v268 = vperm.slane %v219, 7
        %v271 = vperm.slane %v267, 3
        %v272 = vperm.slane %v268, 3
        %v273 = vmul.f32 %v265, %v271
        %v274 = vmul.f32 %v265, %v272
        %v275 = vadd.f32 %v261, %v273
        %v276 = vadd.f32 %v262, %v274
        %v277 = vld [vmem:[%s1] sm:$0x7]
        %279 = vset.pattern.permute.xlu0 0
        %280 = vperm.xlu0 %279, %v277
        %v281 = vpop.permute.xlu0 %280
        %v283 = vadd.f32 %v275, %v281
        %v284 = vadd.f32 %v276, %v281
        %v287 = vrot.slane %v284, 4
        %vm288 = vcmask 1043456
        %v289 = vsel %vm288, %v283, %v287
        %291 = vst [vmem:[%s217] sm:$0x77] %v289
        %s292 = smul.u32 2, %s22
        %p293 = scmp.lt.s32.totalorder %s21, 1
        %s294 = scalar_select %p293, %s21, 1
        %p295 = scmp.lt.s32.totalorder %s292, 1
        %s296 = scalar_select %p295, %s292, 1
        %s297 = smul.addr %s294, 2
        %s298 = sadd.s32 %s296, %s297
        %s299 = smul.addr %s298, 4
        %s300 = scalar_lea.vmem %s3, %s299
        // Predicated region
        $region37: #{tpu_custom_call.1} parent=31 // pred_check
          %p301 = pneg %p119
        $region38: #{tpu_custom_call.1} parent=31 // pred_check_branch
          %303 = sbr.rel (%p301) target = $region40
        $region39: #{tpu_custom_call.1} parent=31 // pred_region
          %s304 = smul.u32 2, %s22
        $region40: #{tpu_custom_call.1} parent=31 // pred_fallthru
          _
      $region32: #{tpu_custom_call.1} parent=5 // pred_fallthru
        _
      %p305 = scmp.le.s32.totalorder 2, %s12
      // Predicated region
      $region41: #{tpu_custom_call.1} parent=5 // pred_check
        %p306 = pneg %p305
      $region42: #{tpu_custom_call.1} parent=5 // pred_check_branch
        %308 = sbr.rel (%p306) target = $region44
      $region43: #{tpu_custom_call.1} parent=5 // pred_region
        %s309 = ssub.s32 %s12, 2
        // Predicated region
        $region45: #{tpu_custom_call.1} parent=43 // pred_check
          %p310 = pneg %p125
        $region46: #{tpu_custom_call.1} parent=43 // pred_check_branch
          %312 = sbr.rel (%p310) target = $region48
        $region47: #{tpu_custom_call.1} parent=43 // pred_region
          %s313 = smul.u32 2, %s24
          %p314 = scmp.lt.s32.totalorder %s23, 1
          %s315 = scalar_select %p314, %s23, 1
          %p316 = scmp.lt.s32.totalorder %s313, 1
          %s317 = scalar_select %p316, %s313, 1
          %s318 = smul.addr %s315, 2
          %s319 = sadd.s32 %s317, %s318
          %s320 = smul.addr %s319, 4
          %s321 = scalar_lea.vmem %s3, %s320
        $region48: #{tpu_custom_call.1} parent=43 // pred_fallthru
          _
      $region44: #{tpu_custom_call.1} parent=5 // pred_fallthru
        _
    $region6: #{tpu_custom_call.1} parent=1 // loop_footer
      %s16 = sadd.s32 1, %s12
    $region7: #{tpu_custom_call.1} parent=1 // loop_footer_branch
      %11 = sbr.rel target = $region3
    $region8: #{tpu_custom_call.1} parent=1 // loop_exit
      _
    %322 = vsyncpa [#allocation3], 1
    %s323 = scalar_lea.sflag [#allocation3], 1
    %324 = vsyncpa %s323, 1

</llo_original>
